<compile_context>
chip_gen: v7x
topology: tpu7x:2x2x1
jax: 0.10.0
libtpu: 0.0.40
codegen_flags: <defaults>
</compile_context>

<pallas_src>
import numpy as np
import jax
import jax.numpy as jnp
from jax.experimental import pallas as pl
from jax.experimental.pallas import tpu as pltpu


# ----------------------------------------------------------------------------
# Fused Pallas kernel: one composite affine map + ReLU per (batch, T-tile).
# ----------------------------------------------------------------------------
def _ecg_head_kernel(x_ref, wc_ref, bc_ref, o_ref):
    """x_ref : (Tpad + 8, D)   zero-padded decoder tokens (compute dtype);
                               padded row p <-> original token row p - 4.
       wc_ref: (7, D, 10*C)    composite weight; tap t <-> token offset t - 3.
       bc_ref: (1, 10*C)       composite bias (f32).
       o_ref : (Tt, 10*C)      phase-major output tile:
                               o[a, rr*C+co] == out[co, 10*(j*Tt + a) + rr].
    """
    tt = o_ref.shape[0]
    j = pl.program_id(1)
    base = pl.multiple_of(j * tt, 8)          # Tt is a multiple of 8

    acc = jnp.zeros(o_ref.shape, jnp.float32)
    # y[a] = sum_t x_orig[j*Tt + a + t - 3] @ Wc[t]
    #      -> padded row = j*Tt + a + t + 1  (left pad = 4).
    for t in range(7):                        # static 7-tap unroll
        lhs = x_ref[pl.ds(base + t + 1, tt), :]                  # (Tt, D)
        acc = acc + jnp.dot(lhs, wc_ref[t],
                            preferred_element_type=jnp.float32)  # f32 accum
    o_ref[...] = jnp.maximum(acc + bc_ref[...], 0.0).astype(o_ref.dtype)


# ----------------------------------------------------------------------------
# Pure-jnp staged helpers (used both as the validation reference and as the
# probe target for extracting the composite weights).
# ----------------------------------------------------------------------------
def _conv_transpose1d_ref(x_blc, weight, bias, *, stride, padding,
                          output_padding):
    B, L_in, C_in = x_blc.shape
    _, C_out, K = weight.shape
    L_out = (L_in - 1) * stride - 2 * padding + K + output_padding
    L_up = (L_in - 1) * stride + 1
    x_up = jnp.zeros((B, L_up, C_in), x_blc.dtype).at[:, ::stride, :].set(x_blc)
    pad_l = K - 1 - padding
    pad_r = K - 1 - padding + output_padding
    x_pad = jnp.pad(x_up, ((0, 0), (pad_l, pad_r), (0, 0)))
    w_eff = jnp.flip(weight, axis=-1).transpose(2, 0, 1)      # (K, C_in, C_out)
    acc = jnp.zeros((B, L_out, C_out), jnp.float32)
    for k in range(K):
        acc = acc + jnp.einsum("blc,cd->bld", x_pad[:, k:k + L_out, :], w_eff[k])
    return acc + bias.reshape(1, 1, C_out)


def _conv_bn_ref(x_blc, weight, gamma, beta, mean, var, eps=1e-5):
    """Conv1d(k=9, s=1, p=4, no bias) + BatchNorm1d(eval).  NO ReLU."""
    B, L, _ = x_blc.shape
    C_out, _, K = weight.shape
    x_pad = jnp.pad(x_blc, ((0, 0), (4, 4), (0, 0)))
    w_eff = weight.transpose(2, 1, 0)                         # (K, C_in, C_out)
    acc = jnp.zeros((B, L, C_out), jnp.float32)
    for k in range(K):
        acc = acc + jnp.einsum("blc,cd->bld", x_pad[:, k:k + L, :], w_eff[k])
    return (acc - mean) / jnp.sqrt(var + eps) * gamma + beta


def _staged_linear_phase_major(x_td, params, *, eps=1e-5):
    """(T, D) tokens -> (T, 10*C) phase-major PRE-activation of the head."""
    u1 = _conv_transpose1d_ref(x_td[None], params["w_up1"], params["b_up1"],
                               stride=2, padding=3, output_padding=0)
    u2 = _conv_transpose1d_ref(u1, params["w_up2"], params["b_up2"],
                               stride=5, padding=3, output_padding=3)
    y = _conv_bn_ref(u2, params["w_cbr"], params["bn_gamma"], params["bn_beta"],
                     params["bn_mean"], params["bn_var"], eps=eps)   # (1,10T,C)
    T = x_td.shape[0]
    C = params["w_cbr"].shape[0]
    return y[0].reshape(T, 10 * C)          # row a, col rr*C+co == y[10a+rr, co]


def ecg_mae_segmentation_reference(decoder_tokens, params):
    u1 = _conv_transpose1d_ref(decoder_tokens, params["w_up1"], params["b_up1"],
                               stride=2, padding=3, output_padding=0)
    u2 = _conv_transpose1d_ref(u1, params["w_up2"], params["b_up2"],
                               stride=5, padding=3, output_padding=3)
    y = jnp.maximum(
        _conv_bn_ref(u2, params["w_cbr"], params["bn_gamma"], params["bn_beta"],
                     params["bn_mean"], params["bn_var"]), 0.0)
    return y.transpose(0, 2, 1)


# ----------------------------------------------------------------------------
# Parameter preparation (run ONCE, outside jit): compose the full linear chain
# into one 7-tap affine map plus exact boundary-row maps, via jacfwd probing.
# ----------------------------------------------------------------------------
def prepare_params(params, *, eps=1e-5, compute_dtype=jnp.float32):
    D, C, _ = params["w_up1"].shape
    T0, a0 = 16, 7                       # probe length / an interior probe row

    def lin(x_td):
        return _staged_linear_phase_major(x_td, params, eps=eps)

    zeros = jnp.zeros((T0, D), jnp.float32)
    bias_all = lin(zeros)                                  # (T0, 10C)
    jac = jax.jacfwd(lin)(zeros)                           # (T0, 10C, T0, D)

    def row_map(row, lo_t, hi_t):
        # affine weights of output row `row` w.r.t. x rows row-3+lo_t..row-3+hi_t
        sub = jac[row, :, row - 3 + lo_t: row - 2 + hi_t, :]     # (10C, ntap, D)
        return jnp.transpose(sub, (1, 2, 0))                     # (ntap, D, 10C)

    return dict(
        # interior composite map (cast to compute dtype; everything composed f32)
        wc=row_map(a0, 0, 6).astype(compute_dtype),              # (7, D, 10C)
        bc=bias_all[a0].reshape(1, 10 * C).astype(jnp.float32),  # (1, 10C)
        # exact boundary-row maps (kept in f32; applied in the wrapper)
        w_row0=row_map(0, 3, 6), b_row0=bias_all[0],             # x[0:4]
        w_pen=row_map(T0 - 2, 0, 4), b_pen=bias_all[T0 - 2],     # x[T-5:T]
        w_last=row_map(T0 - 1, 0, 3), b_last=bias_all[T0 - 1],   # x[T-4:T]
    )


# ----------------------------------------------------------------------------
# Forward pass (single fused pallas_call).
# ----------------------------------------------------------------------------
def _round_up(n, m):
    return ((n + m - 1) // m) * m


@jax.jit
def ecg_mae_segmentation_forward(decoder_tokens, packed):
    """decoder_tokens: (B, T, mae_decoder_dim) == self.mae(x) output.
       packed: prepare_params(...) output.  Returns (B, class_n, 10*T) f32."""
    B, T, D = decoder_tokens.shape
    wc = packed["wc"]
    C10 = wc.shape[2]
    C = C10 // 10
    if T < 7:
        raise ValueError("T must be >= 7 (boundary maps assume separated ends)")

    # --- T tiling: one tile for small T, 512-row tiles otherwise -------------
    if T <= 512:
        t_tile, nt = _round_up(T, 8), 1
    else:
        t_tile = 512
        nt = -(-T // t_tile)
    t_pad = nt * t_tile

    # Cast ONCE before the kernel (bf16 compute => bf16 input DMA), pad with a
    # 4-row halo on each side plus the tile round-up.
    x = decoder_tokens.astype(wc.dtype)
    x_pad = jnp.pad(x, ((0, 0), (4, t_pad - T + 4), (0, 0)))

    out_pm = pl.pallas_call(
        _ecg_head_kernel,
        out_shape=jax.ShapeDtypeStruct((B, t_pad, C10), jnp.float32),
        grid=(B, nt),
        in_specs=[
            pl.BlockSpec((None, t_pad + 8, D), lambda b, j: (b, 0, 0)),
            pl.BlockSpec((7, D, C10), lambda b, j: (0, 0, 0)),
            pl.BlockSpec((1, C10), lambda b, j: (0, 0)),
        ],
        out_specs=pl.BlockSpec((None, t_tile, C10), lambda b, j: (b, j, 0)),
        compiler_params=pltpu.CompilerParams(
            # no reduction axis: both grid dims independent (v7x 2-TC split)
            dimension_semantics=("parallel", "parallel")),
    )(x_pad, wc, packed["bc"])

    out_pm = out_pm[:, :T, :]

    # --- exact 3-row boundary correction (token rows 0, T-2, T-1) ------------
    # O(B*D) work; the composite map over-counts bias/weight paths through
    # y1/y2 rows that do not exist at the true sequence ends.
    xf = decoder_tokens.astype(jnp.float32)
    row0 = jnp.maximum(
        jnp.einsum("btd,tdo->bo", xf[:, 0:4], packed["w_row0"])
        + packed["b_row0"], 0.0)
    pen = jnp.maximum(
        jnp.einsum("btd,tdo->bo", xf[:, T - 5:T], packed["w_pen"])
        + packed["b_pen"], 0.0)
    last = jnp.maximum(
        jnp.einsum("btd,tdo->bo", xf[:, T - 4:T], packed["w_last"])
        + packed["b_last"], 0.0)
    out_pm = out_pm.at[:, 0].set(row0).at[:, T - 2].set(pen).at[:, T - 1].set(last)

    # phase-major (B, T, 10C) -> NCL (B, C, 10T)
    return out_pm.reshape(B, 10 * T, C).transpose(0, 2, 1)


# ----------------------------------------------------------------------------
# Deterministic parameter init (PyTorch-layout weights)
# ----------------------------------------------------------------------------
def init_params(key, mae_decoder_dim, class_n):
    ks = jax.random.split(key, 8)
    w_up1 = jax.random.normal(ks[0], (mae_decoder_dim, class_n, 8),
                              jnp.float32) / np.sqrt(mae_decoder_dim * 8)
    b_up1 = 0.01 * jax.random.normal(ks[1], (class_n,), jnp.float32)
    w_up2 = jax.random.normal(ks[2], (class_n, class_n, 8),
                              jnp.float32) / np.sqrt(class_n * 8)
    b_up2 = 0.01 * jax.random.normal(ks[3], (class_n,), jnp.float32)
    w_cbr = jax.random.normal(ks[4], (class_n, class_n, 9),
                              jnp.float32) / np.sqrt(class_n * 9)
    bn_gamma = 1.0 + 0.1 * jax.random.normal(ks[5], (class_n,), jnp.float32)
    bn_beta = 0.1 * jax.random.normal(ks[6], (class_n,), jnp.float32)
    bn_mean = 0.1 * jax.random.normal(ks[7], (class_n,), jnp.float32)
    bn_var = jnp.ones((class_n,), jnp.float32)
    return dict(w_up1=w_up1, b_up1=b_up1, w_up2=w_up2, b_up2=b_up2,
                w_cbr=w_cbr, bn_gamma=bn_gamma, bn_beta=bn_beta,
                bn_mean=bn_mean, bn_var=bn_var)


if __name__ == "__main__":
    B, T, D, class_n = 2, 8, 32, 4   # batch, tokens, mae_decoder_dim, classes
    key = jax.random.PRNGKey(0)
    k_x, k_p = jax.random.split(key)
    decoder_tokens = jax.random.normal(k_x, (B, T, D), jnp.float32)
    params = init_params(k_p, D, class_n)

    ref = ecg_mae_segmentation_reference(decoder_tokens, params)

    # f32 path (strict tolerance)
    packed_f32 = prepare_params(params, compute_dtype=jnp.float32)
    out = jax.block_until_ready(
        ecg_mae_segmentation_forward(decoder_tokens, packed_f32))
    assert out.shape == (B, class_n, 10 * T), out.shape
    np.testing.assert_allclose(np.asarray(out), np.asarray(ref),
                               rtol=2e-3, atol=2e-3)

    # bf16 matmul operands / f32 accumulation (MXU-native on v6e/v7x);
    # composite weights are composed in f32 and cast last.
    packed_bf16 = prepare_params(params, compute_dtype=jnp.bfloat16)
    out_bf16 = jax.block_until_ready(
        ecg_mae_segmentation_forward(decoder_tokens, packed_bf16))
    np.testing.assert_allclose(np.asarray(out_bf16), np.asarray(ref),
                               rtol=1e-1, atol=1e-1)

    print("KERNEL_OK")
</pallas_src>

<mosaic_0001>
module attributes {stable_mosaic.version = 11 : i64} {
  func.func @_ecg_head_kernel(%arg0: i32, %arg1: i32, %arg2: memref<1x16x32xf32, #tpu.memory_space<vmem>>, %arg3: memref<7x32x40xf32, #tpu.memory_space<vmem>>, %arg4: memref<1x40xf32, #tpu.memory_space<vmem>>, %arg5: memref<1x8x40xf32, #tpu.memory_space<vmem>>) attributes {dimension_semantics = [#tpu.dimension_semantics<parallel>, #tpu.dimension_semantics<parallel>], iteration_bounds = array<i64: 2, 1>, scalar_prefetch = 0 : i64, scratch_operands = 0 : i64, tpu.core_type = #tpu.core_type<tc>, window_params = [{transform_indices = @transform_0, window_bounds = array<i64: 1, 16, 32>}, {pipeline_mode = #tpu.pipeline_mode<synchronous>, transform_indices = @transform_1, window_bounds = array<i64: 7, 32, 40>}, {pipeline_mode = #tpu.pipeline_mode<synchronous>, transform_indices = @transform_2, window_bounds = array<i64: 1, 40>}, {transform_indices = @transform_3, window_bounds = array<i64: 1, 8, 40>}]} {
    %c8_i32 = arith.constant 8 : i32
    %0 = arith.muli %arg1, %c8_i32 : i32
    %1 = tpu.assume_multiple %0, 8 : i32
    %cst = arith.constant 0.000000e+00 : f32
    %2 = vector.broadcast %cst : f32 to vector<8x40xf32>
    %c0_i32 = arith.constant 0 : i32
    %3 = arith.addi %1, %c0_i32 : i32
    %c1_i32 = arith.constant 1 : i32
    %4 = arith.addi %3, %c1_i32 : i32
    %c0 = arith.constant 0 : index
    %5 = arith.index_cast %4 : i32 to index
    %c0_0 = arith.constant 0 : index
    %6 = vector.load %arg2[%c0, %5, %c0_0] : memref<1x16x32xf32, #tpu.memory_space<vmem>>, vector<1x8x32xf32>
    %7 = vector.shape_cast %6 : vector<1x8x32xf32> to vector<8x32xf32>
    %c0_1 = arith.constant 0 : index
    %c0_2 = arith.constant 0 : index
    %c0_3 = arith.constant 0 : index
    %8 = vector.load %arg3[%c0_1, %c0_2, %c0_3] : memref<7x32x40xf32, #tpu.memory_space<vmem>>, vector<1x32x40xf32>
    %9 = vector.shape_cast %8 : vector<1x32x40xf32> to vector<32x40xf32>
    %cst_4 = arith.constant dense<0.000000e+00> : vector<8x40xf32>
    %10 = tpu.matmul %7, %9, %cst_4 {dimension_numbers = #tpu.dot_dimension_numbers<[1], [0], [0], [1], [0, 0, 1, 1], [], []>} : vector<8x32xf32>, vector<32x40xf32>, vector<8x40xf32> -> vector<8x40xf32>
    %11 = arith.addf %2, %10 : vector<8x40xf32>
    %c1_i32_5 = arith.constant 1 : i32
    %12 = arith.addi %1, %c1_i32_5 : i32
    %c1_i32_6 = arith.constant 1 : i32
    %13 = arith.addi %12, %c1_i32_6 : i32
    %c0_7 = arith.constant 0 : index
    %14 = arith.index_cast %13 : i32 to index
    %c0_8 = arith.constant 0 : index
    %15 = vector.load %arg2[%c0_7, %14, %c0_8] : memref<1x16x32xf32, #tpu.memory_space<vmem>>, vector<1x8x32xf32>
    %16 = vector.shape_cast %15 : vector<1x8x32xf32> to vector<8x32xf32>
    %c1 = arith.constant 1 : index
    %c0_9 = arith.constant 0 : index
    %c0_10 = arith.constant 0 : index
    %17 = vector.load %arg3[%c1, %c0_9, %c0_10] : memref<7x32x40xf32, #tpu.memory_space<vmem>>, vector<1x32x40xf32>
    %18 = vector.shape_cast %17 : vector<1x32x40xf32> to vector<32x40xf32>
    %cst_11 = arith.constant dense<0.000000e+00> : vector<8x40xf32>
    %19 = tpu.matmul %16, %18, %cst_11 {dimension_numbers = #tpu.dot_dimension_numbers<[1], [0], [0], [1], [0, 0, 1, 1], [], []>} : vector<8x32xf32>, vector<32x40xf32>, vector<8x40xf32> -> vector<8x40xf32>
    %20 = arith.addf %11, %19 : vector<8x40xf32>
    %c2_i32 = arith.constant 2 : i32
    %21 = arith.addi %1, %c2_i32 : i32
    %c1_i32_12 = arith.constant 1 : i32
    %22 = arith.addi %21, %c1_i32_12 : i32
    %c0_13 = arith.constant 0 : index
    %23 = arith.index_cast %22 : i32 to index
    %c0_14 = arith.constant 0 : index
    %24 = vector.load %arg2[%c0_13, %23, %c0_14] : memref<1x16x32xf32, #tpu.memory_space<vmem>>, vector<1x8x32xf32>
    %25 = vector.shape_cast %24 : vector<1x8x32xf32> to vector<8x32xf32>
    %c2 = arith.constant 2 : index
    %c0_15 = arith.constant 0 : index
    %c0_16 = arith.constant 0 : index
    %26 = vector.load %arg3[%c2, %c0_15, %c0_16] : memref<7x32x40xf32, #tpu.memory_space<vmem>>, vector<1x32x40xf32>
    %27 = vector.shape_cast %26 : vector<1x32x40xf32> to vector<32x40xf32>
    %cst_17 = arith.constant dense<0.000000e+00> : vector<8x40xf32>
    %28 = tpu.matmul %25, %27, %cst_17 {dimension_numbers = #tpu.dot_dimension_numbers<[1], [0], [0], [1], [0, 0, 1, 1], [], []>} : vector<8x32xf32>, vector<32x40xf32>, vector<8x40xf32> -> vector<8x40xf32>
    %29 = arith.addf %20, %28 : vector<8x40xf32>
    %c3_i32 = arith.constant 3 : i32
    %30 = arith.addi %1, %c3_i32 : i32
    %c1_i32_18 = arith.constant 1 : i32
    %31 = arith.addi %30, %c1_i32_18 : i32
    %c0_19 = arith.constant 0 : index
    %32 = arith.index_cast %31 : i32 to index
    %c0_20 = arith.constant 0 : index
    %33 = vector.load %arg2[%c0_19, %32, %c0_20] : memref<1x16x32xf32, #tpu.memory_space<vmem>>, vector<1x8x32xf32>
    %34 = vector.shape_cast %33 : vector<1x8x32xf32> to vector<8x32xf32>
    %c3 = arith.constant 3 : index
    %c0_21 = arith.constant 0 : index
    %c0_22 = arith.constant 0 : index
    %35 = vector.load %arg3[%c3, %c0_21, %c0_22] : memref<7x32x40xf32, #tpu.memory_space<vmem>>, vector<1x32x40xf32>
    %36 = vector.shape_cast %35 : vector<1x32x40xf32> to vector<32x40xf32>
    %cst_23 = arith.constant dense<0.000000e+00> : vector<8x40xf32>
    %37 = tpu.matmul %34, %36, %cst_23 {dimension_numbers = #tpu.dot_dimension_numbers<[1], [0], [0], [1], [0, 0, 1, 1], [], []>} : vector<8x32xf32>, vector<32x40xf32>, vector<8x40xf32> -> vector<8x40xf32>
    %38 = arith.addf %29, %37 : vector<8x40xf32>
    %c4_i32 = arith.constant 4 : i32
    %39 = arith.addi %1, %c4_i32 : i32
    %c1_i32_24 = arith.constant 1 : i32
    %40 = arith.addi %39, %c1_i32_24 : i32
    %c0_25 = arith.constant 0 : index
    %41 = arith.index_cast %40 : i32 to index
    %c0_26 = arith.constant 0 : index
    %42 = vector.load %arg2[%c0_25, %41, %c0_26] : memref<1x16x32xf32, #tpu.memory_space<vmem>>, vector<1x8x32xf32>
    %43 = vector.shape_cast %42 : vector<1x8x32xf32> to vector<8x32xf32>
    %c4 = arith.constant 4 : index
    %c0_27 = arith.constant 0 : index
    %c0_28 = arith.constant 0 : index
    %44 = vector.load %arg3[%c4, %c0_27, %c0_28] : memref<7x32x40xf32, #tpu.memory_space<vmem>>, vector<1x32x40xf32>
    %45 = vector.shape_cast %44 : vector<1x32x40xf32> to vector<32x40xf32>
    %cst_29 = arith.constant dense<0.000000e+00> : vector<8x40xf32>
    %46 = tpu.matmul %43, %45, %cst_29 {dimension_numbers = #tpu.dot_dimension_numbers<[1], [0], [0], [1], [0, 0, 1, 1], [], []>} : vector<8x32xf32>, vector<32x40xf32>, vector<8x40xf32> -> vector<8x40xf32>
    %47 = arith.addf %38, %46 : vector<8x40xf32>
    %c5_i32 = arith.constant 5 : i32
    %48 = arith.addi %1, %c5_i32 : i32
    %c1_i32_30 = arith.constant 1 : i32
    %49 = arith.addi %48, %c1_i32_30 : i32
    %c0_31 = arith.constant 0 : index
    %50 = arith.index_cast %49 : i32 to index
    %c0_32 = arith.constant 0 : index
    %51 = vector.load %arg2[%c0_31, %50, %c0_32] : memref<1x16x32xf32, #tpu.memory_space<vmem>>, vector<1x8x32xf32>
    %52 = vector.shape_cast %51 : vector<1x8x32xf32> to vector<8x32xf32>
    %c5 = arith.constant 5 : index
    %c0_33 = arith.constant 0 : index
    %c0_34 = arith.constant 0 : index
    %53 = vector.load %arg3[%c5, %c0_33, %c0_34] : memref<7x32x40xf32, #tpu.memory_space<vmem>>, vector<1x32x40xf32>
    %54 = vector.shape_cast %53 : vector<1x32x40xf32> to vector<32x40xf32>
    %cst_35 = arith.constant dense<0.000000e+00> : vector<8x40xf32>
    %55 = tpu.matmul %52, %54, %cst_35 {dimension_numbers = #tpu.dot_dimension_numbers<[1], [0], [0], [1], [0, 0, 1, 1], [], []>} : vector<8x32xf32>, vector<32x40xf32>, vector<8x40xf32> -> vector<8x40xf32>
    %56 = arith.addf %47, %55 : vector<8x40xf32>
    %c6_i32 = arith.constant 6 : i32
    %57 = arith.addi %1, %c6_i32 : i32
    %c1_i32_36 = arith.constant 1 : i32
    %58 = arith.addi %57, %c1_i32_36 : i32
    %c0_37 = arith.constant 0 : index
    %59 = arith.index_cast %58 : i32 to index
    %c0_38 = arith.constant 0 : index
    %60 = vector.load %arg2[%c0_37, %59, %c0_38] : memref<1x16x32xf32, #tpu.memory_space<vmem>>, vector<1x8x32xf32>
    %61 = vector.shape_cast %60 : vector<1x8x32xf32> to vector<8x32xf32>
    %c6 = arith.constant 6 : index
    %c0_39 = arith.constant 0 : index
    %c0_40 = arith.constant 0 : index
    %62 = vector.load %arg3[%c6, %c0_39, %c0_40] : memref<7x32x40xf32, #tpu.memory_space<vmem>>, vector<1x32x40xf32>
    %63 = vector.shape_cast %62 : vector<1x32x40xf32> to vector<32x40xf32>
    %cst_41 = arith.constant dense<0.000000e+00> : vector<8x40xf32>
    %64 = tpu.matmul %61, %63, %cst_41 {dimension_numbers = #tpu.dot_dimension_numbers<[1], [0], [0], [1], [0, 0, 1, 1], [], []>} : vector<8x32xf32>, vector<32x40xf32>, vector<8x40xf32> -> vector<8x40xf32>
    %65 = arith.addf %56, %64 : vector<8x40xf32>
    %c0_42 = arith.constant 0 : index
    %c0_43 = arith.constant 0 : index
    %66 = vector.load %arg4[%c0_42, %c0_43] : memref<1x40xf32, #tpu.memory_space<vmem>>, vector<1x40xf32>
    %67 = vector.broadcast %66 : vector<1x40xf32> to vector<8x40xf32>
    %68 = arith.addf %65, %67 : vector<8x40xf32>
    %cst_44 = arith.constant 0.000000e+00 : f32
    %69 = vector.broadcast %cst_44 : f32 to vector<8x40xf32>
    %70 = arith.maximumf %68, %69 : vector<8x40xf32>
    %c0_45 = arith.constant 0 : index
    %c0_46 = arith.constant 0 : index
    %c0_47 = arith.constant 0 : index
    %71 = vector.load %arg5[%c0_45, %c0_46, %c0_47] : memref<1x8x40xf32, #tpu.memory_space<vmem>>, vector<1x8x40xf32>
    %72 = vector.shape_cast %71 : vector<1x8x40xf32> to vector<8x40xf32>
    %73 = vector.shape_cast %70 : vector<8x40xf32> to vector<1x8x40xf32>
    tpu.vector_store %arg5[%c0_45, %c0_46, %c0_47], %73 {strides = array<i32>} : memref<1x8x40xf32, #tpu.memory_space<vmem>>, vector<1x8x40xf32>,
    return
  }
  func.func @transform_0(%arg0: i32, %arg1: i32) -> (i32, i32, i32) {
    %c0_i32 = arith.constant 0 : i32
    %c0_i32_0 = arith.constant 0 : i32
    %c0_i32_1 = arith.constant 0 : i32
    return %arg0, %c0_i32, %c0_i32_0 : i32, i32, i32
  }
  func.func @transform_1(%arg0: i32, %arg1: i32) -> (i32, i32, i32) {
    %c0_i32 = arith.constant 0 : i32
    %c0_i32_0 = arith.constant 0 : i32
    %c0_i32_1 = arith.constant 0 : i32
    %c0_i32_2 = arith.constant 0 : i32
    return %c0_i32, %c0_i32_0, %c0_i32_1 : i32, i32, i32
  }
  func.func @transform_2(%arg0: i32, %arg1: i32) -> (i32, i32) {
    %c0_i32 = arith.constant 0 : i32
    %c0_i32_0 = arith.constant 0 : i32
    %c0_i32_1 = arith.constant 0 : i32
    return %c0_i32, %c0_i32_0 : i32, i32
  }
  func.func @transform_3(%arg0: i32, %arg1: i32) -> (i32, i32, i32) {
    %c0_i32 = arith.constant 0 : i32
    %c0_i32_0 = arith.constant 0 : i32
    return %arg0, %arg1, %c0_i32 : i32, i32, i32
  }
}

</mosaic_0001>

<llo_original>
// kernel: ecg_mae_segmentation_forward.1
$region0: #{ecg_mae_segmentation_forward.1}
  #allocation0 [shape = 'u32[]', space=smem, size = 0x4, offset = 0x4, fixed_abs, tag = 'smem constant byte address 0x4 - core index']
  #allocation1 [shape = 'u32[144,128]{1,0:T(1,128)}', space=vmem, size = 0x12000, scoped, tag = 'internal scratch']
  %s0 = inlined_call_operand.vmem [shape: f32[2,16,32], index: 0, kind: input, shape index: {}]
  %s1 = inlined_call_operand.vmem [shape: f32[7,32,40], index: 1, kind: input, shape index: {}]
  %s2 = inlined_call_operand.vmem [shape: f32[1,40], index: 2, kind: input, shape index: {}]
  %s3 = inlined_call_operand.vmem [shape: f32[2,8,40], index: 3, kind: output, shape index: {}]
  %s4 = sld [smem:[#allocation0]]
  $region45: #{ecg_mae_segmentation_forward.1} parent=0
    _
  %s6 = ssub.s32 1, %s4
  %s7 = scalar_select 0, %s6, %s4
  loop: start=0, step=1, limit=4
  $region2: #{ecg_mae_segmentation_forward.1} parent=0 // loop_pre_header
    _
  $region3: #{ecg_mae_segmentation_forward.1} parent=0 // loop_header
    %s9 = sphi 0, %s13
    %p10 = scmp.ge.s32.totalorder %s9, 4
    %s16 = sphi 0, %s28
    %s17 = sphi 0, %s24
    %s18 = sphi 0, %s16
    %s19 = sphi 0, %s17
    %s20 = sphi 0, %s18
    %s21 = sphi 0, %s19
    %s31 = sphi 0, %s33
    %s34 = sphi 0, %s31
    %s35 = sphi 0, %s34
    %s51 = sphi 0, %s35
    %s55 = sphi 0, %s55
    %s57 = sphi 0, %s55
    %s58 = sphi 0, %s57
    %s72 = sphi 0, %s58
    %s76 = sphi 0, %s76
    %s78 = sphi 0, %s76
    %s79 = sphi 0, %s78
    %s93 = sphi 0, %s79
    %s101 = sphi 0, %s103
    %s104 = sphi 0, %s101
    %s105 = sphi 0, %s104
    %s121 = sphi 0, %s105
  $region4: #{ecg_mae_segmentation_forward.1} parent=0 // loop_header_branch
    %12 = sbr.rel (%p10) target = $region8
  $region5: #{ecg_mae_segmentation_forward.1} parent=0 // loop_body
    %s14 = ssub.s32 %s9, 1
    %s15 = ssub.s32 %s9, 2
    %s22 = sadd.s32 1, %s17
    %p23 = scmp.ge.s32.totalorder %s22, 1
    %s24 = scalar_select %p23, 0, %s22
    %s25 = sadd.s32 1, %s16
    %s26 = scalar_select %p23, %s25, %s16
    %p27 = scmp.ge.s32.totalorder %s26, 2
    %s28 = scalar_select %p27, 0, %s26
    %s29 = ssub.s32 %s16, %s28
    %p30 = scmp.eq.s32.totalorder %s29, 0
    %s32 = sadd.s32 %s31, 1
    %s33 = scalar_select %p30, %s31, %s32
    %p36 = pneg %p30
    %p37 = scmp.eq.s32.totalorder %s9, 1
    %p38 = por %p36, %p37
    %p39 = scmp.ne.s32.totalorder %s31, %s34
    %p40 = scmp.eq.s32.totalorder %s9, 0
    %p41 = por %p39, %p40
    %p42 = scmp.ne.s32.totalorder %s31, %s34
    %p43 = scmp.eq.s32.totalorder %s14, 1
    %p44 = por %p42, %p43
    %p45 = scmp.ne.s32.totalorder %s34, %s35
    %p46 = scmp.eq.s32.totalorder %s14, 0
    %p47 = por %p45, %p46
    %p48 = scmp.ne.s32.totalorder %s34, %s35
    %p49 = scmp.eq.s32.totalorder %s15, 1
    %p50 = por %p48, %p49
    %p52 = scmp.ne.s32.totalorder %s35, %s51
    %p53 = scmp.eq.s32.totalorder %s15, 0
    %p54 = por %p52, %p53
    %s56 = sadd.s32 %s55, 1
    %p59 = scmp.eq.s32.totalorder %s9, 1
    %p60 = scmp.ne.s32.totalorder %s55, %s57
    %p61 = scmp.eq.s32.totalorder %s9, 0
    %p62 = por %p60, %p61
    %p63 = scmp.ne.s32.totalorder %s55, %s57
    %p64 = scmp.eq.s32.totalorder %s14, 1
    %p65 = por %p63, %p64
    %p66 = scmp.ne.s32.totalorder %s57, %s58
    %p67 = scmp.eq.s32.totalorder %s14, 0
    %p68 = por %p66, %p67
    %p69 = scmp.ne.s32.totalorder %s57, %s58
    %p70 = scmp.eq.s32.totalorder %s15, 1
    %p71 = por %p69, %p70
    %p73 = scmp.ne.s32.totalorder %s58, %s72
    %p74 = scmp.eq.s32.totalorder %s15, 0
    %p75 = por %p73, %p74
    %s77 = sadd.s32 %s76, 1
    %p80 = scmp.eq.s32.totalorder %s9, 1
    %p81 = scmp.ne.s32.totalorder %s76, %s78
    %p82 = scmp.eq.s32.totalorder %s9, 0
    %p83 = por %p81, %p82
    %p84 = scmp.ne.s32.totalorder %s76, %s78
    %p85 = scmp.eq.s32.totalorder %s14, 1
    %p86 = por %p84, %p85
    %p87 = scmp.ne.s32.totalorder %s78, %s79
    %p88 = scmp.eq.s32.totalorder %s14, 0
    %p89 = por %p87, %p88
    %p90 = scmp.ne.s32.totalorder %s78, %s79
    %p91 = scmp.eq.s32.totalorder %s15, 1
    %p92 = por %p90, %p91
    %p94 = scmp.ne.s32.totalorder %s79, %s93
    %p95 = scmp.eq.s32.totalorder %s15, 0
    %p96 = por %p94, %p95
    %s97 = ssub.s32 %s16, %s28
    %s98 = ssub.s32 %s17, %s24
    %s99 = sor.u32 %s97, %s98
    %p100 = scmp.eq.s32.totalorder %s99, 0
    %s102 = sadd.s32 %s101, 1
    %s103 = scalar_select %p100, %s101, %s102
    %p106 = pneg %p100
    %p107 = scmp.eq.s32.totalorder %s9, 1
    %p108 = por %p106, %p107
    %p109 = scmp.ne.s32.totalorder %s101, %s104
    %p110 = scmp.eq.s32.totalorder %s9, 0
    %p111 = por %p109, %p110
    %p112 = scmp.ne.s32.totalorder %s101, %s104
    %p113 = scmp.eq.s32.totalorder %s14, 1
    %p114 = por %p112, %p113
    %p115 = scmp.ne.s32.totalorder %s104, %s105
    %p116 = scmp.eq.s32.totalorder %s14, 0
    %p117 = por %p115, %p116
    %p118 = scmp.ne.s32.totalorder %s104, %s105
    %p119 = scmp.eq.s32.totalorder %s15, 1
    %p120 = por %p118, %p119
    %p122 = scmp.ne.s32.totalorder %s105, %s121
    %p123 = scmp.eq.s32.totalorder %s15, 0
    %p124 = por %p122, %p123
    %p125 = scmp.le.s32.totalorder 1, %s9
    %p126 = scmp.lt.s32.totalorder %s9, 3
    %p127 = pnand %p125, %p126
    %p128 = pneg %p127
    // Predicated region
    $region9: #{ecg_mae_segmentation_forward.1} parent=5 // pred_check
      _
    $region10: #{ecg_mae_segmentation_forward.1} parent=5 // pred_check_branch
      %130 = sbr.rel (%p127) target = $region12
    $region11: #{ecg_mae_segmentation_forward.1} parent=5 // pred_region
      %s131 = ssub.s32 %s9, 1
      // Predicated region
      $region13: #{ecg_mae_segmentation_forward.1} parent=11 // pred_check
        %p132 = pneg %p68
      $region14: #{ecg_mae_segmentation_forward.1} parent=11 // pred_check_branch
        %134 = sbr.rel (%p132) target = $region16
      $region15: #{ecg_mae_segmentation_forward.1} parent=11 // pred_region
        _
      $region16: #{ecg_mae_segmentation_forward.1} parent=11 // pred_fallthru
        _
      // Predicated region
      $region17: #{ecg_mae_segmentation_forward.1} parent=11 // pred_check
        %p135 = pneg %p89
      $region18: #{ecg_mae_segmentation_forward.1} parent=11 // pred_check_branch
        %137 = sbr.rel (%p135) target = $region20
      $region19: #{ecg_mae_segmentation_forward.1} parent=11 // pred_region
        _
      $region20: #{ecg_mae_segmentation_forward.1} parent=11 // pred_fallthru
        _
    $region12: #{ecg_mae_segmentation_forward.1} parent=5 // pred_fallthru
      _
    %p138 = scmp.lt.s32.totalorder %s9, 2
    // Predicated region
    $region21: #{ecg_mae_segmentation_forward.1} parent=5 // pred_check
      %p139 = pneg %p138
    $region22: #{ecg_mae_segmentation_forward.1} parent=5 // pred_check_branch
      %141 = sbr.rel (%p139) target = $region24
    $region23: #{ecg_mae_segmentation_forward.1} parent=5 // pred_region
      // Predicated region
      $region25: #{ecg_mae_segmentation_forward.1} parent=23 // pred_check
        %p142 = pneg %p41
      $region26: #{ecg_mae_segmentation_forward.1} parent=23 // pred_check_branch
        %144 = sbr.rel (%p142) target = $region28
      $region27: #{ecg_mae_segmentation_forward.1} parent=23 // pred_region
        %p145 = scmp.lt.s32.totalorder %s16, 1
        %s146 = scalar_select %p145, %s16, 1
        %s147 = smul.addr %s146, 2
        %s148 = smul.addr %s147, 8
        %s149 = scalar_lea.vmem %s0, %s148
      $region28: #{ecg_mae_segmentation_forward.1} parent=23 // pred_fallthru
        _
    $region24: #{ecg_mae_segmentation_forward.1} parent=5 // pred_fallthru
      _
    %p150 = scmp.le.s32.totalorder 1, %s9
    %p151 = scmp.lt.s32.totalorder %s9, 3
    %p152 = pnand %p150, %p151
    %p153 = pneg %p152
    // Predicated region
    $region29: #{ecg_mae_segmentation_forward.1} parent=5 // pred_check
      _
    $region30: #{ecg_mae_segmentation_forward.1} parent=5 // pred_check_branch
      %155 = sbr.rel (%p152) target = $region32
    $region31: #{ecg_mae_segmentation_forward.1} parent=5 // pred_region
      %s156 = ssub.s32 %s9, 1
      %p157 = scmp.lt.s32.totalorder %s18, 1
      %s158 = scalar_select %p157, %s18, 1
      %s159 = smul.addr %s158, 2
      %s160 = smul.addr %s159, 8
      %s161 = scalar_lea.vmem %s0, %s160
      %p162 = pneg %p47
      %p163 = pneg %p44
      %p164 = pneg %p68
      %p165 = pneg %p65
      %p166 = pneg %p89
      %p167 = pneg %p86
      %p168 = pneg %p117
      %p169 = pneg %p114
      %p170 = scmp.lt.s32.totalorder %s18, 1
      %s171 = scalar_select %p170, %s18, 1
      %p172 = scmp.lt.s32.totalorder %s19, 0
      %s173 = scalar_select %p172, %s19, 0
      %s174 = sadd.s32 %s173, %s171
      %s175 = smul.addr %s174, 8
      %s176 = scalar_lea.vmem %s3, %s175
      %p177 = scmp.lt.s32.totalorder %s18, 1
      %s178 = scalar_select %p177, %s18, 1
      %s179 = smul.addr %s178, 2
      %s180 = smul.addr %s179, 8
      %s181 = scalar_lea.vmem %s0, %s180
      %p182 = scmp.lt.s32.totalorder %s18, 1
      %s183 = scalar_select %p182, %s18, 1
      %p184 = scmp.lt.s32.totalorder %s19, 0
      %s185 = scalar_select %p184, %s19, 0
      %s186 = sadd.s32 %s185, %s183
      %s187 = smul.addr %s186, 8
      %s188 = scalar_lea.vmem %s3, %s187
      %s189 = smul.u32 %s19, 8
      %s190 = sadd.s32 %s189, 1
      %s191 = scalar_lea.vmem %s181, %s190
      %v192 = vld [vmem:[%s191] sm:$0xff]
      %v193 = vld [vmem:[%s1] sm:$0xff]
      %v194 = vld [vmem:[%s1 + $0x8] sm:$0xff]
      %v195 = vld [vmem:[%s1 + $0x10] sm:$0xff]
      %v196 = vld [vmem:[%s1 + $0x18] sm:$0xff]
      %s197 = sadd.s32 %s189, 2
      %s198 = scalar_lea.vmem %s181, %s197
      %v199 = vld [vmem:[%s198] sm:$0xff]
      %s200 = scalar_lea.vmem %s1, 32
      %v201 = vld [vmem:[%s200] sm:$0xff]
      %v202 = vld [vmem:[%s200 + $0x8] sm:$0xff]
      %v203 = vld [vmem:[%s200 + $0x10] sm:$0xff]
      %v204 = vld [vmem:[%s200 + $0x18] sm:$0xff]
      %vm205 = vcmask 261120
      %v207 = vsel %vm205, %v199, 0
      %209 = vmatprep.subr.mxu0 0.0
      %210 = vmatpush1.msra.mxu0 %v201
      %211 = vmatprep.subr.mxu0 0.0
      %212 = vmatpush1.msra.mxu0 %v202
      %213 = vmatprep.subr.mxu0 0.0
      %214 = vmatpush1.msra.mxu0 %v203
      %215 = vmatprep.subr.mxu0 0.0
      %216 = vmatpush1.msra.mxu0 %v204
      %217 = vmatprep.subr.mxu0 0.0
      %218 = vmatpush1.msra.mxu0 0.0
      %219 = vmatprep.subr.mxu0 0.0
      %220 = vmatpush1.msra.mxu0 0.0
      %221 = vmatprep.subr.mxu0 0.0
      %222 = vmatpush1.msra.mxu0 0.0
      %223 = vmatprep.subr.mxu0 0.0
      %224 = vmatpush1.msra.mxu0 0.0
      %225 = vmatprep.subr.mxu0 0.0
      %226 = vmatpush1.msra.mxu0 0.0
      %227 = vmatprep.subr.mxu0 0.0
      %228 = vmatpush1.msra.mxu0 0.0
      %229 = vmatprep.subr.mxu0 0.0
      %230 = vmatpush1.msra.mxu0 0.0
      %231 = vmatprep.subr.mxu0 0.0
      %232 = vmatpush1.msra.mxu0 0.0
      %233 = vmatprep.subr.mxu0 0.0
      %234 = vmatpush1.msra.mxu0 0.0
      %235 = vmatprep.subr.mxu0 0.0
      %236 = vmatpush1.msra.mxu0 0.0
      %237 = vmatprep.subr.mxu0 0.0
      %238 = vmatpush1.msra.mxu0 0.0
      %239 = vmatprep.subr.mxu0 0.0
      %240 = vmatpush1.msra.mxu0 0.0
      %241 = vmatprep.subr.mxu0 0.0
      %242 = vmatpush1.msra.mxu0 0.0
      %243 = vmatprep.subr.mxu0 0.0
      %244 = vmatpush1.msra.mxu0 0.0
      %245 = vmatprep.subr.mxu0 0.0
      %246 = vmatpush1.msra.mxu0 0.0
      %247 = vmatprep.subr.mxu0 0.0
      %248 = vmatpush1.msra.mxu0 0.0
      %249 = vmatprep.subr.mxu0 0.0
      %250 = vmatpush1.msra.mxu0 0.0
      %251 = vmatprep.subr.mxu0 0.0
      %252 = vmatpush1.msra.mxu0 0.0
      %253 = vmatprep.subr.mxu0 0.0
      %254 = vmatpush1.msra.mxu0 0.0
      %255 = vmatprep.subr.mxu0 0.0
      %256 = vmatpush1.msra.mxu0 0.0
      %257 = vmatprep.subr.mxu0 0.0
      %258 = vmatpush1.msra.mxu0 0.0
      %259 = vmatprep.subr.mxu0 0.0
      %260 = vmatpush1.msra.mxu0 0.0
      %261 = vmatprep.subr.mxu0 0.0
      %262 = vmatpush1.msra.mxu0 0.0
      %263 = vmatprep.subr.mxu0 0.0
      %264 = vmatpush1.msra.mxu0 0.0
      %265 = vmatprep.subr.mxu0 0.0
      %266 = vmatpush1.msra.mxu0 0.0
      %267 = vmatprep.subr.mxu0 0.0
      %268 = vmatpush1.msra.mxu0 0.0
      %269 = vmatprep.subr.mxu0 0.0
      %270 = vmatpush1.msra.mxu0 0.0
      %271 = vmatprep.subr.mxu0 0.0
      %272 = vmatpush1.msra.mxu0 0.0
      %273 = vmatprep.mubr.f32.mxu0 0.0
      %274 = vmatmul.mubr.f32.gmra.mrb[0].mxu0 %v207
      %v275 = vpop.f32.mrb[0].mxu0
      %v276 = vadd.f32 0.0, %v275
      %v277 = vpop.f32.mrb[0].mxu0
      %278 = vdwg.mxu0
      %v280 = vsel %vm205, %v192, 0
      %282 = vmatprep.subr.mxu0 0.0
      %283 = vmatpush1.msra.mxu0 %v193
      %284 = vmatprep.subr.mxu0 0.0
      %285 = vmatpush1.msra.mxu0 %v194
      %286 = vmatprep.subr.mxu0 0.0
      %287 = vmatpush1.msra.mxu0 %v195
      %288 = vmatprep.subr.mxu0 0.0
      %289 = vmatpush1.msra.mxu0 %v196
      %290 = vmatprep.subr.mxu0 0.0
      %291 = vmatpush1.msra.mxu0 0.0
      %292 = vmatprep.subr.mxu0 0.0
      %293 = vmatpush1.msra.mxu0 0.0
      %294 = vmatprep.subr.mxu0 0.0
      %295 = vmatpush1.msra.mxu0 0.0
      %296 = vmatprep.subr.mxu0 0.0
      %297 = vmatpush1.msra.mxu0 0.0
      %298 = vmatprep.subr.mxu0 0.0
      %299 = vmatpush1.msra.mxu0 0.0
      %300 = vmatprep.subr.mxu0 0.0
      %301 = vmatpush1.msra.mxu0 0.0
      %302 = vmatprep.subr.mxu0 0.0
      %303 = vmatpush1.msra.mxu0 0.0
      %304 = vmatprep.subr.mxu0 0.0
      %305 = vmatpush1.msra.mxu0 0.0
      %306 = vmatprep.subr.mxu0 0.0
      %307 = vmatpush1.msra.mxu0 0.0
      %308 = vmatprep.subr.mxu0 0.0
      %309 = vmatpush1.msra.mxu0 0.0
      %310 = vmatprep.subr.mxu0 0.0
      %311 = vmatpush1.msra.mxu0 0.0
      %312 = vmatprep.subr.mxu0 0.0
      %313 = vmatpush1.msra.mxu0 0.0
      %314 = vmatprep.subr.mxu0 0.0
      %315 = vmatpush1.msra.mxu0 0.0
      %316 = vmatprep.subr.mxu0 0.0
      %317 = vmatpush1.msra.mxu0 0.0
      %318 = vmatprep.subr.mxu0 0.0
      %319 = vmatpush1.msra.mxu0 0.0
      %320 = vmatprep.subr.mxu0 0.0
      %321 = vmatpush1.msra.mxu0 0.0
      %322 = vmatprep.subr.mxu0 0.0
      %323 = vmatpush1.msra.mxu0 0.0
      %324 = vmatprep.subr.mxu0 0.0
      %325 = vmatpush1.msra.mxu0 0.0
      %326 = vmatprep.subr.mxu0 0.0
      %327 = vmatpush1.msra.mxu0 0.0
      %328 = vmatprep.subr.mxu0 0.0
      %329 = vmatpush1.msra.mxu0 0.0
      %330 = vmatprep.subr.mxu0 0.0
      %331 = vmatpush1.msra.mxu0 0.0
      %332 = vmatprep.subr.mxu0 0.0
      %333 = vmatpush1.msra.mxu0 0.0
      %334 = vmatprep.subr.mxu0 0.0
      %335 = vmatpush1.msra.mxu0 0.0
      %336 = vmatprep.subr.mxu0 0.0
      %337 = vmatpush1.msra.mxu0 0.0
      %338 = vmatprep.subr.mxu0 0.0
      %339 = vmatpush1.msra.mxu0 0.0
      %340 = vmatprep.subr.mxu0 0.0
      %341 = vmatpush1.msra.mxu0 0.0
      %342 = vmatprep.subr.mxu0 0.0
      %343 = vmatpush1.msra.mxu0 0.0
      %344 = vmatprep.subr.mxu0 0.0
      %345 = vmatpush1.msra.mxu0 0.0
      %346 = vmatprep.mubr.f32.mxu0 0.0
      %347 = vmatmul.mubr.f32.gmra.mrb[0].mxu0 %v280
      %v348 = vpop.f32.mrb[0].mxu0
      %v349 = vadd.f32 %v276, %v348
      %v350 = vpop.f32.mrb[0].mxu0
      %351 = vdwg.mxu0
      %s352 = sadd.s32 %s189, 3
      %s353 = scalar_lea.vmem %s181, %s352
      %v354 = vld [vmem:[%s353] sm:$0xff]
      %s355 = scalar_lea.vmem %s1, 64
      %v356 = vld [vmem:[%s355] sm:$0xff]
      %v357 = vld [vmem:[%s355 + $0x8] sm:$0xff]
      %v358 = vld [vmem:[%s355 + $0x10] sm:$0xff]
      %v359 = vld [vmem:[%s355 + $0x18] sm:$0xff]
      %v361 = vsel %vm205, %v354, 0
      %363 = vmatprep.subr.mxu0 0.0
      %364 = vmatpush1.msra.mxu0 %v356
      %365 = vmatprep.subr.mxu0 0.0
      %366 = vmatpush1.msra.mxu0 %v357
      %367 = vmatprep.subr.mxu0 0.0
      %368 = vmatpush1.msra.mxu0 %v358
      %369 = vmatprep.subr.mxu0 0.0
      %370 = vmatpush1.msra.mxu0 %v359
      %371 = vmatprep.subr.mxu0 0.0
      %372 = vmatpush1.msra.mxu0 0.0
      %373 = vmatprep.subr.mxu0 0.0
      %374 = vmatpush1.msra.mxu0 0.0
      %375 = vmatprep.subr.mxu0 0.0
      %376 = vmatpush1.msra.mxu0 0.0
      %377 = vmatprep.subr.mxu0 0.0
      %378 = vmatpush1.msra.mxu0 0.0
      %379 = vmatprep.subr.mxu0 0.0
      %380 = vmatpush1.msra.mxu0 0.0
      %381 = vmatprep.subr.mxu0 0.0
      %382 = vmatpush1.msra.mxu0 0.0
      %383 = vmatprep.subr.mxu0 0.0
      %384 = vmatpush1.msra.mxu0 0.0
      %385 = vmatprep.subr.mxu0 0.0
      %386 = vmatpush1.msra.mxu0 0.0
      %387 = vmatprep.subr.mxu0 0.0
      %388 = vmatpush1.msra.mxu0 0.0
      %389 = vmatprep.subr.mxu0 0.0
      %390 = vmatpush1.msra.mxu0 0.0
      %391 = vmatprep.subr.mxu0 0.0
      %392 = vmatpush1.msra.mxu0 0.0
      %393 = vmatprep.subr.mxu0 0.0
      %394 = vmatpush1.msra.mxu0 0.0
      %395 = vmatprep.subr.mxu0 0.0
      %396 = vmatpush1.msra.mxu0 0.0
      %397 = vmatprep.subr.mxu0 0.0
      %398 = vmatpush1.msra.mxu0 0.0
      %399 = vmatprep.subr.mxu0 0.0
      %400 = vmatpush1.msra.mxu0 0.0
      %401 = vmatprep.subr.mxu0 0.0
      %402 = vmatpush1.msra.mxu0 0.0
      %403 = vmatprep.subr.mxu0 0.0
      %404 = vmatpush1.msra.mxu0 0.0
      %405 = vmatprep.subr.mxu0 0.0
      %406 = vmatpush1.msra.mxu0 0.0
      %407 = vmatprep.subr.mxu0 0.0
      %408 = vmatpush1.msra.mxu0 0.0
      %409 = vmatprep.subr.mxu0 0.0
      %410 = vmatpush1.msra.mxu0 0.0
      %411 = vmatprep.subr.mxu0 0.0
      %412 = vmatpush1.msra.mxu0 0.0
      %413 = vmatprep.subr.mxu0 0.0
      %414 = vmatpush1.msra.mxu0 0.0
      %415 = vmatprep.subr.mxu0 0.0
      %416 = vmatpush1.msra.mxu0 0.0
      %417 = vmatprep.subr.mxu0 0.0
      %418 = vmatpush1.msra.mxu0 0.0
      %419 = vmatprep.subr.mxu0 0.0
      %420 = vmatpush1.msra.mxu0 0.0
      %421 = vmatprep.subr.mxu0 0.0
      %422 = vmatpush1.msra.mxu0 0.0
      %423 = vmatprep.subr.mxu0 0.0
      %424 = vmatpush1.msra.mxu0 0.0
      %425 = vmatprep.subr.mxu0 0.0
      %426 = vmatpush1.msra.mxu0 0.0
      %427 = vmatprep.mubr.f32.mxu0 0.0
      %428 = vmatmul.mubr.f32.gmra.mrb[0].mxu0 %v361
      %v429 = vpop.f32.mrb[0].mxu0
      %v430 = vadd.f32 0.0, %v429
      %v431 = vpop.f32.mrb[0].mxu0
      %432 = vdwg.mxu0
      %v433 = vadd.f32 %v349, %v430
      %s434 = sadd.s32 %s189, 4
      %s435 = scalar_lea.vmem %s181, %s434
      %v436 = vld [vmem:[%s435] sm:$0xff]
      %s437 = scalar_lea.vmem %s1, 96
      %v438 = vld [vmem:[%s437] sm:$0xff]
      %v439 = vld [vmem:[%s437 + $0x8] sm:$0xff]
      %v440 = vld [vmem:[%s437 + $0x10] sm:$0xff]
      %v441 = vld [vmem:[%s437 + $0x18] sm:$0xff]
      %v443 = vsel %vm205, %v436, 0
      %445 = vmatprep.subr.mxu0 0.0
      %446 = vmatpush1.msra.mxu0 %v438
      %447 = vmatprep.subr.mxu0 0.0
      %448 = vmatpush1.msra.mxu0 %v439
      %449 = vmatprep.subr.mxu0 0.0
      %450 = vmatpush1.msra.mxu0 %v440
      %451 = vmatprep.subr.mxu0 0.0
      %452 = vmatpush1.msra.mxu0 %v441
      %453 = vmatprep.subr.mxu0 0.0
      %454 = vmatpush1.msra.mxu0 0.0
      %455 = vmatprep.subr.mxu0 0.0
      %456 = vmatpush1.msra.mxu0 0.0
      %457 = vmatprep.subr.mxu0 0.0
      %458 = vmatpush1.msra.mxu0 0.0
      %459 = vmatprep.subr.mxu0 0.0
      %460 = vmatpush1.msra.mxu0 0.0
      %461 = vmatprep.subr.mxu0 0.0
      %462 = vmatpush1.msra.mxu0 0.0
      %463 = vmatprep.subr.mxu0 0.0
      %464 = vmatpush1.msra.mxu0 0.0
      %465 = vmatprep.subr.mxu0 0.0
      %466 = vmatpush1.msra.mxu0 0.0
      %467 = vmatprep.subr.mxu0 0.0
      %468 = vmatpush1.msra.mxu0 0.0
      %469 = vmatprep.subr.mxu0 0.0
      %470 = vmatpush1.msra.mxu0 0.0
      %471 = vmatprep.subr.mxu0 0.0
      %472 = vmatpush1.msra.mxu0 0.0
      %473 = vmatprep.subr.mxu0 0.0
      %474 = vmatpush1.msra.mxu0 0.0
      %475 = vmatprep.subr.mxu0 0.0
      %476 = vmatpush1.msra.mxu0 0.0
      %477 = vmatprep.subr.mxu0 0.0
      %478 = vmatpush1.msra.mxu0 0.0
      %479 = vmatprep.subr.mxu0 0.0
      %480 = vmatpush1.msra.mxu0 0.0
      %481 = vmatprep.subr.mxu0 0.0
      %482 = vmatpush1.msra.mxu0 0.0
      %483 = vmatprep.subr.mxu0 0.0
      %484 = vmatpush1.msra.mxu0 0.0
      %485 = vmatprep.subr.mxu0 0.0
      %486 = vmatpush1.msra.mxu0 0.0
      %487 = vmatprep.subr.mxu0 0.0
      %488 = vmatpush1.msra.mxu0 0.0
      %489 = vmatprep.subr.mxu0 0.0
      %490 = vmatpush1.msra.mxu0 0.0
      %491 = vmatprep.subr.mxu0 0.0
      %492 = vmatpush1.msra.mxu0 0.0
      %493 = vmatprep.subr.mxu0 0.0
      %494 = vmatpush1.msra.mxu0 0.0
      %495 = vmatprep.subr.mxu0 0.0
      %496 = vmatpush1.msra.mxu0 0.0
      %497 = vmatprep.subr.mxu0 0.0
      %498 = vmatpush1.msra.mxu0 0.0
      %499 = vmatprep.subr.mxu0 0.0
      %500 = vmatpush1.msra.mxu0 0.0
      %501 = vmatprep.subr.mxu0 0.0
      %502 = vmatpush1.msra.mxu0 0.0
      %503 = vmatprep.subr.mxu0 0.0
      %504 = vmatpush1.msra.mxu0 0.0
      %505 = vmatprep.subr.mxu0 0.0
      %506 = vmatpush1.msra.mxu0 0.0
      %507 = vmatprep.subr.mxu0 0.0
      %508 = vmatpush1.msra.mxu0 0.0
      %509 = vmatprep.mubr.f32.mxu0 0.0
      %510 = vmatmul.mubr.f32.gmra.mrb[0].mxu0 %v443
      %v511 = vpop.f32.mrb[0].mxu0
      %v512 = vadd.f32 0.0, %v511
      %v513 = vpop.f32.mrb[0].mxu0
      %514 = vdwg.mxu0
      %v515 = vadd.f32 %v433, %v512
      %s516 = sadd.s32 %s189, 5
      %s517 = scalar_lea.vmem %s181, %s516
      %v518 = vld [vmem:[%s517] sm:$0xff]
      %s519 = scalar_lea.vmem %s1, 128
      %v520 = vld [vmem:[%s519] sm:$0xff]
      %v521 = vld [vmem:[%s519 + $0x8] sm:$0xff]
      %v522 = vld [vmem:[%s519 + $0x10] sm:$0xff]
      %v523 = vld [vmem:[%s519 + $0x18] sm:$0xff]
      %v525 = vsel %vm205, %v518, 0
      %527 = vmatprep.subr.mxu0 0.0
      %528 = vmatpush1.msra.mxu0 %v520
      %529 = vmatprep.subr.mxu0 0.0
      %530 = vmatpush1.msra.mxu0 %v521
      %531 = vmatprep.subr.mxu0 0.0
      %532 = vmatpush1.msra.mxu0 %v522
      %533 = vmatprep.subr.mxu0 0.0
      %534 = vmatpush1.msra.mxu0 %v523
      %535 = vmatprep.subr.mxu0 0.0
      %536 = vmatpush1.msra.mxu0 0.0
      %537 = vmatprep.subr.mxu0 0.0
      %538 = vmatpush1.msra.mxu0 0.0
      %539 = vmatprep.subr.mxu0 0.0
      %540 = vmatpush1.msra.mxu0 0.0
      %541 = vmatprep.subr.mxu0 0.0
      %542 = vmatpush1.msra.mxu0 0.0
      %543 = vmatprep.subr.mxu0 0.0
      %544 = vmatpush1.msra.mxu0 0.0
      %545 = vmatprep.subr.mxu0 0.0
      %546 = vmatpush1.msra.mxu0 0.0
      %547 = vmatprep.subr.mxu0 0.0
      %548 = vmatpush1.msra.mxu0 0.0
      %549 = vmatprep.subr.mxu0 0.0
      %550 = vmatpush1.msra.mxu0 0.0
      %551 = vmatprep.subr.mxu0 0.0
      %552 = vmatpush1.msra.mxu0 0.0
      %553 = vmatprep.subr.mxu0 0.0
      %554 = vmatpush1.msra.mxu0 0.0
      %555 = vmatprep.subr.mxu0 0.0
      %556 = vmatpush1.msra.mxu0 0.0
      %557 = vmatprep.subr.mxu0 0.0
      %558 = vmatpush1.msra.mxu0 0.0
      %559 = vmatprep.subr.mxu0 0.0
      %560 = vmatpush1.msra.mxu0 0.0
      %561 = vmatprep.subr.mxu0 0.0
      %562 = vmatpush1.msra.mxu0 0.0
      %563 = vmatprep.subr.mxu0 0.0
      %564 = vmatpush1.msra.mxu0 0.0
      %565 = vmatprep.subr.mxu0 0.0
      %566 = vmatpush1.msra.mxu0 0.0
      %567 = vmatprep.subr.mxu0 0.0
      %568 = vmatpush1.msra.mxu0 0.0
      %569 = vmatprep.subr.mxu0 0.0
      %570 = vmatpush1.msra.mxu0 0.0
      %571 = vmatprep.subr.mxu0 0.0
      %572 = vmatpush1.msra.mxu0 0.0
      %573 = vmatprep.subr.mxu0 0.0
      %574 = vmatpush1.msra.mxu0 0.0
      %575 = vmatprep.subr.mxu0 0.0
      %576 = vmatpush1.msra.mxu0 0.0
      %577 = vmatprep.subr.mxu0 0.0
      %578 = vmatpush1.msra.mxu0 0.0
      %579 = vmatprep.subr.mxu0 0.0
      %580 = vmatpush1.msra.mxu0 0.0
      %581 = vmatprep.subr.mxu0 0.0
      %582 = vmatpush1.msra.mxu0 0.0
      %583 = vmatprep.subr.mxu0 0.0
      %584 = vmatpush1.msra.mxu0 0.0
      %585 = vmatprep.subr.mxu0 0.0
      %586 = vmatpush1.msra.mxu0 0.0
      %587 = vmatprep.subr.mxu0 0.0
      %588 = vmatpush1.msra.mxu0 0.0
      %589 = vmatprep.subr.mxu0 0.0
      %590 = vmatpush1.msra.mxu0 0.0
      %591 = vmatprep.mubr.f32.mxu0 0.0
      %592 = vmatmul.mubr.f32.gmra.mrb[0].mxu0 %v525
      %v593 = vpop.f32.mrb[0].mxu0
      %v594 = vadd.f32 0.0, %v593
      %v595 = vpop.f32.mrb[0].mxu0
      %596 = vdwg.mxu0
      %v597 = vadd.f32 %v515, %v594
      %s598 = sadd.s32 %s189, 6
      %s599 = scalar_lea.vmem %s181, %s598
      %v600 = vld [vmem:[%s599] sm:$0xff]
      %s601 = scalar_lea.vmem %s1, 160
      %v602 = vld [vmem:[%s601] sm:$0xff]
      %v603 = vld [vmem:[%s601 + $0x8] sm:$0xff]
      %v604 = vld [vmem:[%s601 + $0x10] sm:$0xff]
      %v605 = vld [vmem:[%s601 + $0x18] sm:$0xff]
      %v607 = vsel %vm205, %v600, 0
      %609 = vmatprep.subr.mxu0 0.0
      %610 = vmatpush1.msra.mxu0 %v602
      %611 = vmatprep.subr.mxu0 0.0
      %612 = vmatpush1.msra.mxu0 %v603
      %613 = vmatprep.subr.mxu0 0.0
      %614 = vmatpush1.msra.mxu0 %v604
      %615 = vmatprep.subr.mxu0 0.0
      %616 = vmatpush1.msra.mxu0 %v605
      %617 = vmatprep.subr.mxu0 0.0
      %618 = vmatpush1.msra.mxu0 0.0
      %619 = vmatprep.subr.mxu0 0.0
      %620 = vmatpush1.msra.mxu0 0.0
      %621 = vmatprep.subr.mxu0 0.0
      %622 = vmatpush1.msra.mxu0 0.0
      %623 = vmatprep.subr.mxu0 0.0
      %624 = vmatpush1.msra.mxu0 0.0
      %625 = vmatprep.subr.mxu0 0.0
      %626 = vmatpush1.msra.mxu0 0.0
      %627 = vmatprep.subr.mxu0 0.0
      %628 = vmatpush1.msra.mxu0 0.0
      %629 = vmatprep.subr.mxu0 0.0
      %630 = vmatpush1.msra.mxu0 0.0
      %631 = vmatprep.subr.mxu0 0.0
      %632 = vmatpush1.msra.mxu0 0.0
      %633 = vmatprep.subr.mxu0 0.0
      %634 = vmatpush1.msra.mxu0 0.0
      %635 = vmatprep.subr.mxu0 0.0
      %636 = vmatpush1.msra.mxu0 0.0
      %637 = vmatprep.subr.mxu0 0.0
      %638 = vmatpush1.msra.mxu0 0.0
      %639 = vmatprep.subr.mxu0 0.0
      %640 = vmatpush1.msra.mxu0 0.0
      %641 = vmatprep.subr.mxu0 0.0
      %642 = vmatpush1.msra.mxu0 0.0
      %643 = vmatprep.subr.mxu0 0.0
      %644 = vmatpush1.msra.mxu0 0.0
      %645 = vmatprep.subr.mxu0 0.0
      %646 = vmatpush1.msra.mxu0 0.0
      %647 = vmatprep.subr.mxu0 0.0
      %648 = vmatpush1.msra.mxu0 0.0
      %649 = vmatprep.subr.mxu0 0.0
      %650 = vmatpush1.msra.mxu0 0.0
      %651 = vmatprep.subr.mxu0 0.0
      %652 = vmatpush1.msra.mxu0 0.0
      %653 = vmatprep.subr.mxu0 0.0
      %654 = vmatpush1.msra.mxu0 0.0
      %655 = vmatprep.subr.mxu0 0.0
      %656 = vmatpush1.msra.mxu0 0.0
      %657 = vmatprep.subr.mxu0 0.0
      %658 = vmatpush1.msra.mxu0 0.0
      %659 = vmatprep.subr.mxu0 0.0
      %660 = vmatpush1.msra.mxu0 0.0
      %661 = vmatprep.subr.mxu0 0.0
      %662 = vmatpush1.msra.mxu0 0.0
      %663 = vmatprep.subr.mxu0 0.0
      %664 = vmatpush1.msra.mxu0 0.0
      %665 = vmatprep.subr.mxu0 0.0
      %666 = vmatpush1.msra.mxu0 0.0
      %667 = vmatprep.subr.mxu0 0.0
      %668 = vmatpush1.msra.mxu0 0.0
      %669 = vmatprep.subr.mxu0 0.0
      %670 = vmatpush1.msra.mxu0 0.0
      %671 = vmatprep.subr.mxu0 0.0
      %672 = vmatpush1.msra.mxu0 0.0
      %673 = vmatprep.mubr.f32.mxu0 0.0
      %674 = vmatmul.mubr.f32.gmra.mrb[0].mxu0 %v607
      %v675 = vpop.f32.mrb[0].mxu0
      %v676 = vadd.f32 0.0, %v675
      %v677 = vpop.f32.mrb[0].mxu0
      %678 = vdwg.mxu0
      %v679 = vadd.f32 %v597, %v676
      %s680 = sadd.s32 %s189, 7
      %s681 = scalar_lea.vmem %s181, %s680
      %v682 = vld [vmem:[%s681] sm:$0xff]
      %s683 = scalar_lea.vmem %s1, 192
      %v684 = vld [vmem:[%s683] sm:$0xff]
      %v685 = vld [vmem:[%s683 + $0x8] sm:$0xff]
      %v686 = vld [vmem:[%s683 + $0x10] sm:$0xff]
      %v687 = vld [vmem:[%s683 + $0x18] sm:$0xff]
      %v689 = vsel %vm205, %v682, 0
      %691 = vmatprep.subr.mxu0 0.0
      %692 = vmatpush1.msra.mxu0 %v684
      %693 = vmatprep.subr.mxu0 0.0
      %694 = vmatpush1.msra.mxu0 %v685
      %695 = vmatprep.subr.mxu0 0.0
      %696 = vmatpush1.msra.mxu0 %v686
      %697 = vmatprep.subr.mxu0 0.0
      %698 = vmatpush1.msra.mxu0 %v687
      %699 = vmatprep.subr.mxu0 0.0
      %700 = vmatpush1.msra.mxu0 0.0
      %701 = vmatprep.subr.mxu0 0.0
      %702 = vmatpush1.msra.mxu0 0.0
      %703 = vmatprep.subr.mxu0 0.0
      %704 = vmatpush1.msra.mxu0 0.0
      %705 = vmatprep.subr.mxu0 0.0
      %706 = vmatpush1.msra.mxu0 0.0
      %707 = vmatprep.subr.mxu0 0.0
      %708 = vmatpush1.msra.mxu0 0.0
      %709 = vmatprep.subr.mxu0 0.0
      %710 = vmatpush1.msra.mxu0 0.0
      %711 = vmatprep.subr.mxu0 0.0
      %712 = vmatpush1.msra.mxu0 0.0
      %713 = vmatprep.subr.mxu0 0.0
      %714 = vmatpush1.msra.mxu0 0.0
      %715 = vmatprep.subr.mxu0 0.0
      %716 = vmatpush1.msra.mxu0 0.0
      %717 = vmatprep.subr.mxu0 0.0
      %718 = vmatpush1.msra.mxu0 0.0
      %719 = vmatprep.subr.mxu0 0.0
      %720 = vmatpush1.msra.mxu0 0.0
      %721 = vmatprep.subr.mxu0 0.0
      %722 = vmatpush1.msra.mxu0 0.0
      %723 = vmatprep.subr.mxu0 0.0
      %724 = vmatpush1.msra.mxu0 0.0
      %725 = vmatprep.subr.mxu0 0.0
      %726 = vmatpush1.msra.mxu0 0.0
      %727 = vmatprep.subr.mxu0 0.0
      %728 = vmatpush1.msra.mxu0 0.0
      %729 = vmatprep.subr.mxu0 0.0
      %730 = vmatpush1.msra.mxu0 0.0
      %731 = vmatprep.subr.mxu0 0.0
      %732 = vmatpush1.msra.mxu0 0.0
      %733 = vmatprep.subr.mxu0 0.0
      %734 = vmatpush1.msra.mxu0 0.0
      %735 = vmatprep.subr.mxu0 0.0
      %736 = vmatpush1.msra.mxu0 0.0
      %737 = vmatprep.subr.mxu0 0.0
      %738 = vmatpush1.msra.mxu0 0.0
      %739 = vmatprep.subr.mxu0 0.0
      %740 = vmatpush1.msra.mxu0 0.0
      %741 = vmatprep.subr.mxu0 0.0
      %742 = vmatpush1.msra.mxu0 0.0
      %743 = vmatprep.subr.mxu0 0.0
      %744 = vmatpush1.msra.mxu0 0.0
      %745 = vmatprep.subr.mxu0 0.0
      %746 = vmatpush1.msra.mxu0 0.0
      %747 = vmatprep.subr.mxu0 0.0
      %748 = vmatpush1.msra.mxu0 0.0
      %749 = vmatprep.subr.mxu0 0.0
      %750 = vmatpush1.msra.mxu0 0.0
      %751 = vmatprep.subr.mxu0 0.0
      %752 = vmatpush1.msra.mxu0 0.0
      %753 = vmatprep.subr.mxu0 0.0
      %754 = vmatpush1.msra.mxu0 0.0
      %755 = vmatprep.mubr.f32.mxu0 0.0
      %756 = vmatmul.mubr.f32.gmra.mrb[0].mxu0 %v689
      %v757 = vpop.f32.mrb[0].mxu0
      %v758 = vadd.f32 0.0, %v757
      %v759 = vpop.f32.mrb[0].mxu0
      %760 = vdwg.mxu0
      %v761 = vadd.f32 %v679, %v758
      %v762 = vld [vmem:[%s2] sm:$0x1]
      %v764 = vlaneseq
      %v765 = vshrl.u32 %v764, 7
      %v766 = vsub.s32 0, %v765
      %v767 = vrot.slane %v762, %v766
      %v769 = vadd.f32 %v761, %v767
      %v770 = vmax.f32 %v769, 0.0
      %vm771 = vcmask 326656
      %772 = vst.msk [vmem:[%s188] sm:$0xff] %vm771, %v770
      %p773 = scmp.lt.s32.totalorder %s18, 1
      %s774 = scalar_select %p773, %s18, 1
      %p775 = scmp.lt.s32.totalorder %s19, 0
      %s776 = scalar_select %p775, %s19, 0
      %s777 = sadd.s32 %s776, %s774
      %s778 = smul.addr %s777, 8
      %s779 = scalar_lea.vmem %s3, %s778
      // Predicated region
      $region33: #{ecg_mae_segmentation_forward.1} parent=31 // pred_check
        %p780 = pneg %p114
      $region34: #{ecg_mae_segmentation_forward.1} parent=31 // pred_check_branch
        %782 = sbr.rel (%p780) target = $region36
      $region35: #{ecg_mae_segmentation_forward.1} parent=31 // pred_region
        _
      $region36: #{ecg_mae_segmentation_forward.1} parent=31 // pred_fallthru
        _
    $region32: #{ecg_mae_segmentation_forward.1} parent=5 // pred_fallthru
      _
    %p783 = scmp.le.s32.totalorder 2, %s9
    // Predicated region
    $region37: #{ecg_mae_segmentation_forward.1} parent=5 // pred_check
      %p784 = pneg %p783
    $region38: #{ecg_mae_segmentation_forward.1} parent=5 // pred_check_branch
      %786 = sbr.rel (%p784) target = $region40
    $region39: #{ecg_mae_segmentation_forward.1} parent=5 // pred_region
      %s787 = ssub.s32 %s9, 2
      // Predicated region
      $region41: #{ecg_mae_segmentation_forward.1} parent=39 // pred_check
        %p788 = pneg %p120
      $region42: #{ecg_mae_segmentation_forward.1} parent=39 // pred_check_branch
        %790 = sbr.rel (%p788) target = $region44
      $region43: #{ecg_mae_segmentation_forward.1} parent=39 // pred_region
        %p791 = scmp.lt.s32.totalorder %s20, 1
        %s792 = scalar_select %p791, %s20, 1
        %p793 = scmp.lt.s32.totalorder %s21, 0
        %s794 = scalar_select %p793, %s21, 0
        %s795 = sadd.s32 %s794, %s792
        %s796 = smul.addr %s795, 8
        %s797 = scalar_lea.vmem %s3, %s796
      $region44: #{ecg_mae_segmentation_forward.1} parent=39 // pred_fallthru
        _
    $region40: #{ecg_mae_segmentation_forward.1} parent=5 // pred_fallthru
      _
  $region6: #{ecg_mae_segmentation_forward.1} parent=0 // loop_footer
    %s13 = sadd.s32 1, %s9
  $region7: #{ecg_mae_segmentation_forward.1} parent=0 // loop_footer_branch
    %8 = sbr.rel target = $region3
  $region8: #{ecg_mae_segmentation_forward.1} parent=0 // loop_exit
    _

</llo_original>
